<compile_context>
chip_gen: v5e
topology: v5e:2x2
jax: 0.10.0
libtpu: 0.0.40
codegen_flags: <defaults>
</compile_context>

<pallas_src>
import functools

import jax
import jax.numpy as jnp
from jax.experimental import pallas as pl
from jax.experimental.pallas import tpu as pltpu


def _round_up(n, m):
    return ((n + m - 1) // m) * m


# --------------------------------------------------------------------------
# Kernel
# --------------------------------------------------------------------------
def actor_kernel(x_ref, w1_ref, b1_ref, w2_ref, b2_ref, w3_ref, b3_ref,
                 o_ref, *, pos_min, pos_max, out_dim):
    """Fused MLP: (Linear->ReLU) x2 -> Linear -> tanh -> affine rescale.

    Hidden/output feature axes of the weights are zero-padded to 128-lane
    multiples, so every matmul is lane-dense; the padded columns carry exact
    zeros through both ReLUs.  Only the true `out_dim` lanes are written out.
    """
    x = x_ref[...].astype(jnp.float32)

    h = jnp.dot(x, w1_ref[...], preferred_element_type=jnp.float32)
    h = jnp.maximum(h + b1_ref[...], 0.0)                        # ReLU

    h = jnp.dot(h, w2_ref[...], preferred_element_type=jnp.float32)
    h = jnp.maximum(h + b2_ref[...], 0.0)                        # ReLU

    y = jnp.dot(h, w3_ref[...], preferred_element_type=jnp.float32) + b3_ref[...]
    y = jnp.tanh(y[:, :out_dim])            # drop padded lanes before EUP/store

    scale = (pos_max - pos_min) * 0.5
    shift = (pos_max + pos_min) * 0.5
    o_ref[...] = (scale * y + shift).astype(o_ref.dtype)


# --------------------------------------------------------------------------
# Param handling
# --------------------------------------------------------------------------
def init_actor_params(key, state_dim, goal_dim, hidden_dims):
    """Kaiming-normal (fan_in, a=0) weights, zero biases — matches
    Actor.init_weights(init_type='kaiming'). Weights stored [in, out]."""
    in_dim = state_dim + goal_dim
    dims = [in_dim] + list(hidden_dims) + [state_dim]
    params = []
    for i in range(len(dims) - 1):
        key, sub = jax.random.split(key)
        fan_in, fan_out = dims[i], dims[i + 1]
        std = (2.0 / fan_in) ** 0.5
        w = std * jax.random.normal(sub, (fan_in, fan_out), dtype=jnp.float32)
        b = jnp.zeros((1, fan_out), dtype=jnp.float32)
        params += [w, b]
    return tuple(params)


def prepare_actor_params(params):
    """One-time conversion to the kernel layout: zero-pad every hidden/output
    (lane) axis of the weights to a multiple of 128 so the in-kernel matmuls
    are lane-dense.  W1 stays fused over [state; goal] (the concat is done
    once on the input side).  Returns (kernel_params, true_out_dim)."""
    w1, b1, w2, b2, w3, b3 = params
    h1, h2, out = w1.shape[1], w2.shape[1], w3.shape[1]
    h1p, h2p, outp = _round_up(h1, 128), _round_up(h2, 128), _round_up(out, 128)

    w1p = jnp.pad(w1, ((0, 0), (0, h1p - h1)))
    b1p = jnp.pad(b1, ((0, 0), (0, h1p - h1)))
    w2p = jnp.pad(w2, ((0, h1p - h1), (0, h2p - h2)))
    b2p = jnp.pad(b2, ((0, 0), (0, h2p - h2)))
    w3p = jnp.pad(w3, ((0, h2p - h2), (0, outp - out)))
    b3p = jnp.pad(b3, ((0, 0), (0, outp - out)))
    return (w1p, b1p, w2p, b2p, w3p, b3p), out


# --------------------------------------------------------------------------
# Tiling
# --------------------------------------------------------------------------
def _choose_batch_tiling(B, block_b):
    """Pick (TB, Bp) so padding is minimal (<= 7 rows per tile) and, for
    B >= 256, there are >= 2 tiles so v7x's second TensorCore has work."""
    num_tiles = max(1, pl.cdiv(B, block_b))
    if num_tiles == 1 and B >= 256:
        num_tiles = 2
    TB = _round_up(pl.cdiv(B, num_tiles), 8)     # sublane-aligned, minimal pad
    return TB, num_tiles * TB


# --------------------------------------------------------------------------
# Wrapper
# --------------------------------------------------------------------------
def actor_forward(state, goal, prepared, pos_min, pos_max, *, block_b=512):
    """prepared = prepare_actor_params(raw_params)."""
    (w1, b1, w2, b2, w3, b3), out_dim = prepared

    # Single concat (fuses torch.cat + first-layer split); native dtype kept,
    # cast to f32 happens inside the kernel.
    x = jnp.concatenate([state, goal], axis=1)
    B, in_dim = x.shape
    h1p, h2p, outp = w1.shape[1], w2.shape[1], w3.shape[1]

    TB, Bp = _choose_batch_tiling(B, block_b)
    if Bp != B:
        x = jnp.pad(x, ((0, Bp - B), (0, 0)))
    grid = (Bp // TB,)

    pinned = lambda a: pl.BlockSpec(a.shape, lambda i: (0, 0))   # VMEM-resident

    kernel = functools.partial(actor_kernel, pos_min=float(pos_min),
                               pos_max=float(pos_max), out_dim=out_dim)

    weight_bytes = 4 * sum(int(a.size) for a in (w1, b1, w2, b2, w3, b3))
    cost = pl.CostEstimate(
        flops=2 * Bp * (in_dim * h1p + h1p * h2p + h2p * outp),
        transcendentals=Bp * out_dim,
        bytes_accessed=(x.dtype.itemsize * Bp * in_dim
                        + 4 * Bp * out_dim + weight_bytes),
    )

    out = pl.pallas_call(
        kernel,
        out_shape=jax.ShapeDtypeStruct((Bp, out_dim), jnp.float32),
        grid=grid,
        in_specs=[
            pl.BlockSpec((TB, in_dim), lambda i: (i, 0)),
            pinned(w1), pinned(b1),
            pinned(w2), pinned(b2),
            pinned(w3), pinned(b3),
        ],
        out_specs=pl.BlockSpec((TB, out_dim), lambda i: (i, 0)),
        compiler_params=pltpu.CompilerParams(
            dimension_semantics=("parallel",)),
        cost_estimate=cost,
    )(x, w1, b1, w2, b2, w3, b3)

    return out if Bp == B else out[:B]


# --------------------------------------------------------------------------
# Pure-JAX reference
# --------------------------------------------------------------------------
def actor_reference(state, goal, params, pos_min, pos_max):
    w1, b1, w2, b2, w3, b3 = params
    dot = functools.partial(jnp.dot, precision=jax.lax.Precision.HIGHEST)
    x = jnp.concatenate([state, goal], axis=1).astype(jnp.float32)
    x = jnp.maximum(dot(x, w1) + b1, 0.0)
    x = jnp.maximum(dot(x, w2) + b2, 0.0)
    x = jnp.tanh(dot(x, w3) + b3)
    return (pos_max - pos_min) / 2.0 * x + (pos_max + pos_min) / 2.0


if __name__ == "__main__":
    key = jax.random.PRNGKey(0)

    # ---- Test 1: small shapes, single tile --------------------------------
    batch, state_dim, goal_dim = 8, 8, 8
    hidden_dims = [32, 32]
    pos_min, pos_max = -1.0, 1.0

    key, k_s, k_g, k_p = jax.random.split(key, 4)
    state = jax.random.normal(k_s, (batch, state_dim), dtype=jnp.float32)
    goal = jax.random.normal(k_g, (batch, goal_dim), dtype=jnp.float32)
    params = init_actor_params(k_p, state_dim, goal_dim, hidden_dims)
    prepared = prepare_actor_params(params)

    out = jax.block_until_ready(
        actor_forward(state, goal, prepared, pos_min, pos_max))
    ref = actor_reference(state, goal, params, pos_min, pos_max)
    assert out.shape == (batch, state_dim)
    assert jnp.allclose(out, ref, atol=1e-5, rtol=1e-5)

    # ---- Test 2: ragged batch, multi-tile grid, default hidden dims -------
    batch2, state_dim2, goal_dim2 = 300, 8, 5
    hidden_dims2 = [256, 256]
    pos_min2, pos_max2 = -0.5, 2.0

    key, k_s2, k_g2, k_p2 = jax.random.split(key, 4)
    state2 = jax.random.normal(k_s2, (batch2, state_dim2), dtype=jnp.float32)
    goal2 = jax.random.normal(k_g2, (batch2, goal_dim2), dtype=jnp.float32)
    params2 = init_actor_params(k_p2, state_dim2, goal_dim2, hidden_dims2)
    prepared2 = prepare_actor_params(params2)

    out2 = jax.block_until_ready(
        actor_forward(state2, goal2, prepared2, pos_min2, pos_max2))
    ref2 = actor_reference(state2, goal2, params2, pos_min2, pos_max2)
    assert out2.shape == (batch2, state_dim2)
    assert jnp.allclose(out2, ref2, atol=1e-4, rtol=1e-4)

    print("KERNEL_OK")
</pallas_src>

<mosaic_0001>
module attributes {stable_mosaic.version = 11 : i64} {
  func.func @actor_kernel(%arg0: i32, %arg1: memref<8x16xf32, #tpu.memory_space<vmem>>, %arg2: memref<16x128xf32, #tpu.memory_space<vmem>>, %arg3: memref<1x128xf32, #tpu.memory_space<vmem>>, %arg4: memref<128x128xf32, #tpu.memory_space<vmem>>, %arg5: memref<1x128xf32, #tpu.memory_space<vmem>>, %arg6: memref<128x128xf32, #tpu.memory_space<vmem>>, %arg7: memref<1x128xf32, #tpu.memory_space<vmem>>, %arg8: memref<8x8xf32, #tpu.memory_space<vmem>>) attributes {dimension_semantics = [#tpu.dimension_semantics<parallel>], iteration_bounds = array<i64: 1>, scalar_prefetch = 0 : i64, scratch_operands = 0 : i64, tpu.core_type = #tpu.core_type<tc>, window_params = [{transform_indices = @transform_0, window_bounds = array<i64: 8, 16>}, {pipeline_mode = #tpu.pipeline_mode<synchronous>, transform_indices = @transform_1, window_bounds = array<i64: 16, 128>}, {pipeline_mode = #tpu.pipeline_mode<synchronous>, transform_indices = @transform_2, window_bounds = array<i64: 1, 128>}, {pipeline_mode = #tpu.pipeline_mode<synchronous>, transform_indices = @transform_3, window_bounds = array<i64: 128, 128>}, {pipeline_mode = #tpu.pipeline_mode<synchronous>, transform_indices = @transform_4, window_bounds = array<i64: 1, 128>}, {pipeline_mode = #tpu.pipeline_mode<synchronous>, transform_indices = @transform_5, window_bounds = array<i64: 128, 128>}, {pipeline_mode = #tpu.pipeline_mode<synchronous>, transform_indices = @transform_6, window_bounds = array<i64: 1, 128>}, {transform_indices = @transform_7, window_bounds = array<i64: 8, 8>}]} {
    %c0 = arith.constant 0 : index
    %c0_0 = arith.constant 0 : index
    %0 = vector.load %arg1[%c0, %c0_0] : memref<8x16xf32, #tpu.memory_space<vmem>>, vector<8x16xf32>
    %c0_1 = arith.constant 0 : index
    %c0_2 = arith.constant 0 : index
    %1 = vector.load %arg2[%c0_1, %c0_2] : memref<16x128xf32, #tpu.memory_space<vmem>>, vector<16x128xf32>
    %cst = arith.constant dense<0.000000e+00> : vector<8x128xf32>
    %2 = tpu.matmul %0, %1, %cst {dimension_numbers = #tpu.dot_dimension_numbers<[1], [0], [0], [1], [0, 0, 1, 1], [], []>} : vector<8x16xf32>, vector<16x128xf32>, vector<8x128xf32> -> vector<8x128xf32>
    %c0_3 = arith.constant 0 : index
    %c0_4 = arith.constant 0 : index
    %3 = vector.load %arg3[%c0_3, %c0_4] : memref<1x128xf32, #tpu.memory_space<vmem>>, vector<1x128xf32>
    %4 = vector.broadcast %3 : vector<1x128xf32> to vector<8x128xf32>
    %5 = arith.addf %2, %4 : vector<8x128xf32>
    %cst_5 = arith.constant 0.000000e+00 : f32
    %6 = vector.broadcast %cst_5 : f32 to vector<8x128xf32>
    %7 = arith.maximumf %5, %6 : vector<8x128xf32>
    %c0_6 = arith.constant 0 : index
    %c0_7 = arith.constant 0 : index
    %8 = vector.load %arg4[%c0_6, %c0_7] : memref<128x128xf32, #tpu.memory_space<vmem>>, vector<128x128xf32>
    %cst_8 = arith.constant dense<0.000000e+00> : vector<8x128xf32>
    %9 = tpu.matmul %7, %8, %cst_8 {dimension_numbers = #tpu.dot_dimension_numbers<[1], [0], [0], [1], [0, 0, 1, 1], [], []>} : vector<8x128xf32>, vector<128x128xf32>, vector<8x128xf32> -> vector<8x128xf32>
    %c0_9 = arith.constant 0 : index
    %c0_10 = arith.constant 0 : index
    %10 = vector.load %arg5[%c0_9, %c0_10] : memref<1x128xf32, #tpu.memory_space<vmem>>, vector<1x128xf32>
    %11 = vector.broadcast %10 : vector<1x128xf32> to vector<8x128xf32>
    %12 = arith.addf %9, %11 : vector<8x128xf32>
    %cst_11 = arith.constant 0.000000e+00 : f32
    %13 = vector.broadcast %cst_11 : f32 to vector<8x128xf32>
    %14 = arith.maximumf %12, %13 : vector<8x128xf32>
    %c0_12 = arith.constant 0 : index
    %c0_13 = arith.constant 0 : index
    %15 = vector.load %arg6[%c0_12, %c0_13] : memref<128x128xf32, #tpu.memory_space<vmem>>, vector<128x128xf32>
    %cst_14 = arith.constant dense<0.000000e+00> : vector<8x128xf32>
    %16 = tpu.matmul %14, %15, %cst_14 {dimension_numbers = #tpu.dot_dimension_numbers<[1], [0], [0], [1], [0, 0, 1, 1], [], []>} : vector<8x128xf32>, vector<128x128xf32>, vector<8x128xf32> -> vector<8x128xf32>
    %c0_15 = arith.constant 0 : index
    %c0_16 = arith.constant 0 : index
    %17 = vector.load %arg7[%c0_15, %c0_16] : memref<1x128xf32, #tpu.memory_space<vmem>>, vector<1x128xf32>
    %18 = vector.broadcast %17 : vector<1x128xf32> to vector<8x128xf32>
    %19 = arith.addf %16, %18 : vector<8x128xf32>
    %20 = vector.extract_strided_slice %19 {offsets = [0, 0], sizes = [8, 8], strides = [1, 1]} : vector<8x128xf32> to vector<8x8xf32>
    %21 = math.tanh %20 : vector<8x8xf32>
    %cst_17 = arith.constant 1.000000e+00 : f32
    %22 = vector.broadcast %cst_17 : f32 to vector<8x8xf32>
    %23 = arith.mulf %22, %21 : vector<8x8xf32>
    %cst_18 = arith.constant 0.000000e+00 : f32
    %24 = vector.broadcast %cst_18 : f32 to vector<8x8xf32>
    %25 = arith.addf %23, %24 : vector<8x8xf32>
    %c0_19 = arith.constant 0 : index
    %c0_20 = arith.constant 0 : index
    %26 = vector.load %arg8[%c0_19, %c0_20] : memref<8x8xf32, #tpu.memory_space<vmem>>, vector<8x8xf32>
    tpu.vector_store %arg8[%c0_19, %c0_20], %25 {strides = array<i32>} : memref<8x8xf32, #tpu.memory_space<vmem>>, vector<8x8xf32>,
    return
  }
  func.func @transform_0(%arg0: i32) -> (i32, i32) {
    %c0_i32 = arith.constant 0 : i32
    %c0_i32_0 = arith.constant 0 : i32
    return %arg0, %c0_i32 : i32, i32
  }
  func.func @transform_1(%arg0: i32) -> (i32, i32) {
    %c0_i32 = arith.constant 0 : i32
    %c0_i32_0 = arith.constant 0 : i32
    %c0_i32_1 = arith.constant 0 : i32
    return %c0_i32, %c0_i32_0 : i32, i32
  }
  func.func @transform_2(%arg0: i32) -> (i32, i32) {
    %c0_i32 = arith.constant 0 : i32
    %c0_i32_0 = arith.constant 0 : i32
    %c0_i32_1 = arith.constant 0 : i32
    return %c0_i32, %c0_i32_0 : i32, i32
  }
  func.func @transform_3(%arg0: i32) -> (i32, i32) {
    %c0_i32 = arith.constant 0 : i32
    %c0_i32_0 = arith.constant 0 : i32
    %c0_i32_1 = arith.constant 0 : i32
    return %c0_i32, %c0_i32_0 : i32, i32
  }
  func.func @transform_4(%arg0: i32) -> (i32, i32) {
    %c0_i32 = arith.constant 0 : i32
    %c0_i32_0 = arith.constant 0 : i32
    %c0_i32_1 = arith.constant 0 : i32
    return %c0_i32, %c0_i32_0 : i32, i32
  }
  func.func @transform_5(%arg0: i32) -> (i32, i32) {
    %c0_i32 = arith.constant 0 : i32
    %c0_i32_0 = arith.constant 0 : i32
    %c0_i32_1 = arith.constant 0 : i32
    return %c0_i32, %c0_i32_0 : i32, i32
  }
  func.func @transform_6(%arg0: i32) -> (i32, i32) {
    %c0_i32 = arith.constant 0 : i32
    %c0_i32_0 = arith.constant 0 : i32
    %c0_i32_1 = arith.constant 0 : i32
    return %c0_i32, %c0_i32_0 : i32, i32
  }
  func.func @transform_7(%arg0: i32) -> (i32, i32) {
    %c0_i32 = arith.constant 0 : i32
    %c0_i32_0 = arith.constant 0 : i32
    return %arg0, %c0_i32 : i32, i32
  }
}

</mosaic_0001>

<llo_original>
// kernel: tpu_custom_call.1
$region0: #{tpu_custom_call.1}
  #allocation0 [shape = 'u32[]', space=smem, size = 0x4, offset = 0x4, fixed_abs, tag = 'smem constant byte address 0x4 - core index']
  #allocation1 [shape = 'u32[72,128]{1,0:T(1,128)}', space=vmem, size = 0x9000, scoped, tag = 'internal scratch']
  %s0 = inlined_call_operand.hbm [shape: f32[8,16], index: 0, kind: input, shape index: {}]
  %s1 = inlined_call_operand.hbm [shape: f32[16,128], index: 1, kind: input, shape index: {}]
  %s2 = inlined_call_operand.vmem [shape: f32[1,128], index: 2, kind: input, shape index: {}]
  %s3 = inlined_call_operand.hbm [shape: f32[128,128], index: 3, kind: input, shape index: {}]
  %s4 = inlined_call_operand.vmem [shape: f32[1,128], index: 4, kind: input, shape index: {}]
  %s5 = inlined_call_operand.hbm [shape: f32[128,128], index: 5, kind: input, shape index: {}]
  %s6 = inlined_call_operand.vmem [shape: f32[1,128], index: 6, kind: input, shape index: {}]
  %s7 = inlined_call_operand.hbm [shape: f32[8,8], index: 7, kind: output, shape index: {}]
  %s8 = sld [smem:[#allocation0]]
  $region54: #{tpu_custom_call.1} parent=0
    _
  %s10 = ssub.s32 1, %s8
  %s11 = scalar_select 0, %s10, %s8
  $region1: #{tpu_custom_call.1} parent=0
    #allocation2 [shape = 'u8[4096]{0}', space=vmem, size = 0x1000, scoped, tag = 'input window, operand 0, single buffered']
    #allocation3 [shape = 's32[1]{0}', space=sflag, size = 0x4, scoped, tag = 'scoped memory for tpu_custom_call.1']
    #allocation4 [shape = 's32[1]{0}', space=sflag, size = 0x4, scoped, tag = 'scoped memory for tpu_custom_call.1']
    #allocation5 [shape = 'u8[8192]{0}', space=vmem, size = 0x2000, scoped, tag = 'input window, operand 1, single buffered']
    #allocation6 [shape = 's32[1]{0}', space=sflag, size = 0x4, scoped, tag = 'scoped memory for tpu_custom_call.1']
    #allocation7 [shape = 'u8[65536]{0}', space=vmem, size = 0x10000, scoped, tag = 'input window, operand 3, single buffered']
    #allocation8 [shape = 'u8[65536]{0}', space=vmem, size = 0x10000, scoped, tag = 'input window, operand 5, single buffered']
    #allocation9 [shape = 's32[1]{0}', space=sflag, size = 0x4, scoped, tag = 'scoped memory for tpu_custom_call.1']
    #allocation10 [shape = 'u8[4096]{0}', space=vmem, size = 0x1000, scoped, tag = 'output window, operand 0, single buffered']
    %12 = vsyncpa [#allocation3], 0
    %13 = vsyncpa [#allocation6], 0
    %14 = vsyncpa [#allocation9], 0
    %15 = vsyncpa [#allocation4], 0
    // Predicated region
    $region2: #{tpu_custom_call.1} parent=1 // pred_check
      _
    $region3: #{tpu_custom_call.1} parent=1 // pred_check_branch
      %17 = sbr.rel (0) target = $region5
    $region4: #{tpu_custom_call.1} parent=1 // pred_region
      %19 = vsyncadd [#allocation3], 0
      %s21 = sshll.u32 %s0, 4
      %s22 = int_to_ptr.hbm [resolvable:$true] %s21
      %s23 = sshll.u32 [#allocation2], 4
      %s24 = int_to_ptr.vmem [resolvable:$true] %s23
      %26 = dma.hbm_to_vmem [thread:$0]  %s22, 128, %s24, [#allocation3]
    $region5: #{tpu_custom_call.1} parent=1 // pred_fallthru
      _
    // Predicated region
    $region6: #{tpu_custom_call.1} parent=1 // pred_check
      _
    $region7: #{tpu_custom_call.1} parent=1 // pred_check_branch
      %28 = sbr.rel (0) target = $region9
    $region8: #{tpu_custom_call.1} parent=1 // pred_region
      %30 = vsyncadd [#allocation6], 0
      %s31 = sshll.u32 %s1, 4
      %s32 = int_to_ptr.hbm [resolvable:$true] %s31
      %s33 = sshll.u32 [#allocation5], 4
      %s34 = int_to_ptr.vmem [resolvable:$true] %s33
      %39 = dma.hbm_to_vmem [thread:$0]  %s32, 256, %s34, [#allocation6], 128, 128, 8
    $region9: #{tpu_custom_call.1} parent=1 // pred_fallthru
      _
    // Predicated region
    $region10: #{tpu_custom_call.1} parent=1 // pred_check
      _
    $region11: #{tpu_custom_call.1} parent=1 // pred_check_branch
      %41 = sbr.rel (0) target = $region13
    $region12: #{tpu_custom_call.1} parent=1 // pred_region
      _
    $region13: #{tpu_custom_call.1} parent=1 // pred_fallthru
      _
    // Predicated region
    $region14: #{tpu_custom_call.1} parent=1 // pred_check
      _
    $region15: #{tpu_custom_call.1} parent=1 // pred_check_branch
      %43 = sbr.rel (0) target = $region17
    $region16: #{tpu_custom_call.1} parent=1 // pred_region
      %45 = vsyncadd [#allocation6], 0
      %s46 = sshll.u32 %s3, 4
      %s47 = int_to_ptr.hbm [resolvable:$true] %s46
      %s48 = sshll.u32 [#allocation7], 4
      %s49 = int_to_ptr.vmem [resolvable:$true] %s48
      %54 = dma.hbm_to_vmem [thread:$0]  %s47, 2048, %s49, [#allocation6], 128, 128, 8
    $region17: #{tpu_custom_call.1} parent=1 // pred_fallthru
      _
    // Predicated region
    $region18: #{tpu_custom_call.1} parent=1 // pred_check
      _
    $region19: #{tpu_custom_call.1} parent=1 // pred_check_branch
      %56 = sbr.rel (0) target = $region21
    $region20: #{tpu_custom_call.1} parent=1 // pred_region
      _
    $region21: #{tpu_custom_call.1} parent=1 // pred_fallthru
      _
    // Predicated region
    $region22: #{tpu_custom_call.1} parent=1 // pred_check
      _
    $region23: #{tpu_custom_call.1} parent=1 // pred_check_branch
      %58 = sbr.rel (0) target = $region25
    $region24: #{tpu_custom_call.1} parent=1 // pred_region
      %60 = vsyncadd [#allocation9], 0
      %s61 = sshll.u32 %s5, 4
      %s62 = int_to_ptr.hbm [resolvable:$true] %s61
      %s63 = sshll.u32 [#allocation8], 4
      %s64 = int_to_ptr.vmem [resolvable:$true] %s63
      %69 = dma.hbm_to_vmem [thread:$0]  %s62, 2048, %s64, [#allocation9], 128, 128, 8
    $region25: #{tpu_custom_call.1} parent=1 // pred_fallthru
      _
    // Predicated region
    $region26: #{tpu_custom_call.1} parent=1 // pred_check
      _
    $region27: #{tpu_custom_call.1} parent=1 // pred_check_branch
      %71 = sbr.rel (0) target = $region29
    $region28: #{tpu_custom_call.1} parent=1 // pred_region
      _
    $region29: #{tpu_custom_call.1} parent=1 // pred_fallthru
      _
    // Predicated region
    $region30: #{tpu_custom_call.1} parent=1 // pred_check
      _
    $region31: #{tpu_custom_call.1} parent=1 // pred_check_branch
      %73 = sbr.rel (0) target = $region33
    $region32: #{tpu_custom_call.1} parent=1 // pred_region
      %75 = dma.done [#allocation3], 128
    $region33: #{tpu_custom_call.1} parent=1 // pred_fallthru
      _
    // Predicated region
    $region34: #{tpu_custom_call.1} parent=1 // pred_check
      _
    $region35: #{tpu_custom_call.1} parent=1 // pred_check_branch
      %77 = sbr.rel (0) target = $region37
    $region36: #{tpu_custom_call.1} parent=1 // pred_region
      %79 = dma.done [#allocation6], 256
    $region37: #{tpu_custom_call.1} parent=1 // pred_fallthru
      _
    // Predicated region
    $region38: #{tpu_custom_call.1} parent=1 // pred_check
      _
    $region39: #{tpu_custom_call.1} parent=1 // pred_check_branch
      %81 = sbr.rel (0) target = $region41
    $region40: #{tpu_custom_call.1} parent=1 // pred_region
      %83 = dma.done [#allocation6], 2048
    $region41: #{tpu_custom_call.1} parent=1 // pred_fallthru
      _
    // Predicated region
    $region42: #{tpu_custom_call.1} parent=1 // pred_check
      _
    $region43: #{tpu_custom_call.1} parent=1 // pred_check_branch
      %85 = sbr.rel (0) target = $region45
    $region44: #{tpu_custom_call.1} parent=1 // pred_region
      %87 = dma.done [#allocation9], 2048
    $region45: #{tpu_custom_call.1} parent=1 // pred_fallthru
      _
    %v88 = vld [vmem:[#allocation2] sm:$0xff]
    %v89 = vld [vmem:[#allocation5] sm:$0xff]
    %v90 = vld [vmem:[#allocation5 + $0x8] sm:$0xff]
    %v91 = vld [vmem:[%s2] sm:$0x1]
    %v93 = vperm.slane %v91, 0
    %vm95 = vcmask 130048
    %v97 = vsel %vm95, %v88, 0
    %99 = vmatpush.msra.mxu0 0.0
    %100 = vmatpush.msra.mxu0 0.0
    %101 = vmatpush.msra.mxu0 0.0
    %102 = vmatpush.msra.mxu0 0.0
    %103 = vmatpush.msra.mxu0 0.0
    %104 = vmatpush.msra.mxu0 0.0
    %105 = vmatpush.msra.mxu0 0.0
    %106 = vmatpush.msra.mxu0 0.0
    %107 = vmatpush.msra.mxu0 0.0
    %108 = vmatpush.msra.mxu0 0.0
    %109 = vmatpush.msra.mxu0 0.0
    %110 = vmatpush.msra.mxu0 0.0
    %111 = vmatpush.msra.mxu0 0.0
    %112 = vmatpush.msra.mxu0 0.0
    %113 = vmatpush.msra.mxu0 %v90
    %114 = vmatpush.msra.mxu0 %v89
    %115 = vmatmul.f32.gmra.mxu0 %v97
    %v116 = vpop.f32.mrf.mxu0
    %v117 = vadd.f32 %v93, %v116
    %118 = vdwg.mxu0
    %v119 = vmax.f32 %v117, 0.0
    %v120 = vld [vmem:[#allocation7] sm:$0xff]
    %v121 = vld [vmem:[#allocation7 + $0x8] sm:$0xff]
    %v122 = vld [vmem:[#allocation7 + $0x10] sm:$0xff]
    %v123 = vld [vmem:[#allocation7 + $0x18] sm:$0xff]
    %v124 = vld [vmem:[#allocation7 + $0x20] sm:$0xff]
    %v125 = vld [vmem:[#allocation7 + $0x28] sm:$0xff]
    %v126 = vld [vmem:[#allocation7 + $0x30] sm:$0xff]
    %v127 = vld [vmem:[#allocation7 + $0x38] sm:$0xff]
    %v128 = vld [vmem:[#allocation7 + $0x40] sm:$0xff]
    %v129 = vld [vmem:[#allocation7 + $0x48] sm:$0xff]
    %v130 = vld [vmem:[#allocation7 + $0x50] sm:$0xff]
    %v131 = vld [vmem:[#allocation7 + $0x58] sm:$0xff]
    %v132 = vld [vmem:[#allocation7 + $0x60] sm:$0xff]
    %v133 = vld [vmem:[#allocation7 + $0x68] sm:$0xff]
    %v134 = vld [vmem:[#allocation7 + $0x70] sm:$0xff]
    %v135 = vld [vmem:[#allocation7 + $0x78] sm:$0xff]
    %v136 = vld [vmem:[%s4] sm:$0x1]
    %v138 = vperm.slane %v136, 0
    %140 = vmatpush.msra.mxu0 %v135
    %141 = vmatpush.msra.mxu0 %v134
    %142 = vmatpush.msra.mxu0 %v133
    %143 = vmatpush.msra.mxu0 %v132
    %144 = vmatpush.msra.mxu0 %v131
    %145 = vmatpush.msra.mxu0 %v130
    %146 = vmatpush.msra.mxu0 %v129
    %147 = vmatpush.msra.mxu0 %v128
    %148 = vmatpush.msra.mxu0 %v127
    %149 = vmatpush.msra.mxu0 %v126
    %150 = vmatpush.msra.mxu0 %v125
    %151 = vmatpush.msra.mxu0 %v124
    %152 = vmatpush.msra.mxu0 %v123
    %153 = vmatpush.msra.mxu0 %v122
    %154 = vmatpush.msra.mxu0 %v121
    %155 = vmatpush.msra.mxu0 %v120
    %156 = vmatmul.f32.gmra.mxu0 %v119
    %v157 = vpop.f32.mrf.mxu0
    %v158 = vadd.f32 %v138, %v157
    %159 = vdwg.mxu0
    %v160 = vmax.f32 %v158, 0.0
    %v161 = vld [vmem:[#allocation8] sm:$0xff]
    %v162 = vld [vmem:[#allocation8 + $0x8] sm:$0xff]
    %v163 = vld [vmem:[#allocation8 + $0x10] sm:$0xff]
    %v164 = vld [vmem:[#allocation8 + $0x18] sm:$0xff]
    %v165 = vld [vmem:[#allocation8 + $0x20] sm:$0xff]
    %v166 = vld [vmem:[#allocation8 + $0x28] sm:$0xff]
    %v167 = vld [vmem:[#allocation8 + $0x30] sm:$0xff]
    %v168 = vld [vmem:[#allocation8 + $0x38] sm:$0xff]
    %v169 = vld [vmem:[#allocation8 + $0x40] sm:$0xff]
    %v170 = vld [vmem:[#allocation8 + $0x48] sm:$0xff]
    %v171 = vld [vmem:[#allocation8 + $0x50] sm:$0xff]
    %v172 = vld [vmem:[#allocation8 + $0x58] sm:$0xff]
    %v173 = vld [vmem:[#allocation8 + $0x60] sm:$0xff]
    %v174 = vld [vmem:[#allocation8 + $0x68] sm:$0xff]
    %v175 = vld [vmem:[#allocation8 + $0x70] sm:$0xff]
    %v176 = vld [vmem:[#allocation8 + $0x78] sm:$0xff]
    %v177 = vld [vmem:[%s6] sm:$0x1]
    %v179 = vperm.slane %v177, 0
    %181 = vmatpush.msra.mxu0 %v176
    %182 = vmatpush.msra.mxu0 %v175
    %183 = vmatpush.msra.mxu0 %v174
    %184 = vmatpush.msra.mxu0 %v173
    %185 = vmatpush.msra.mxu0 %v172
    %186 = vmatpush.msra.mxu0 %v171
    %187 = vmatpush.msra.mxu0 %v170
    %188 = vmatpush.msra.mxu0 %v169
    %189 = vmatpush.msra.mxu0 %v168
    %190 = vmatpush.msra.mxu0 %v167
    %191 = vmatpush.msra.mxu0 %v166
    %192 = vmatpush.msra.mxu0 %v165
    %193 = vmatpush.msra.mxu0 %v164
    %194 = vmatpush.msra.mxu0 %v163
    %195 = vmatpush.msra.mxu0 %v162
    %196 = vmatpush.msra.mxu0 %v161
    %197 = vmatmul.f32.gmra.mxu0 %v160
    %v198 = vpop.f32.mrf.mxu0
    %v199 = vadd.f32 %v179, %v198
    %200 = vdwg.mxu0
    %v201 = vtanh.pop %v199
    %v202 = vadd.f32 %v201, 0.0
    %vm203 = vcmask 64512
    %204 = vst.msk [vmem:[#allocation10] sm:$0xff] %vm203, %v202
    // Predicated region
    $region46: #{tpu_custom_call.1} parent=1 // pred_check
      _
    $region47: #{tpu_custom_call.1} parent=1 // pred_check_branch
      %206 = sbr.rel (0) target = $region49
    $region48: #{tpu_custom_call.1} parent=1 // pred_region
      %208 = vsyncadd [#allocation4], 0
      %s210 = sshll.u32 [#allocation10], 4
      %s211 = int_to_ptr.vmem [resolvable:$true] %s210
      %s212 = sshll.u32 %s7, 4
      %s213 = int_to_ptr.hbm [resolvable:$true] %s212
      %215 = dma.vmem_to_hbm [thread:$0]  %s211, 128, %s213, [#allocation4]
    $region49: #{tpu_custom_call.1} parent=1 // pred_fallthru
      _
    // Predicated region
    $region50: #{tpu_custom_call.1} parent=1 // pred_check
      _
    $region51: #{tpu_custom_call.1} parent=1 // pred_check_branch
      %217 = sbr.rel (0) target = $region53
    $region52: #{tpu_custom_call.1} parent=1 // pred_region
      %219 = dma.done [#allocation4], 128
    $region53: #{tpu_custom_call.1} parent=1 // pred_fallthru
      _
    %220 = vsyncpa [#allocation3], 1
    %221 = vsyncpa [#allocation6], 1
    %222 = vsyncpa [#allocation9], 1
    %223 = vsyncpa [#allocation4], 1

</llo_original>
